<compile_context>
chip_gen: v7x
topology: tpu7x:2x2x1
jax: 0.10.0
libtpu: 0.0.40
codegen_flags: <defaults>
</compile_context>

<pallas_src>
import jax
import jax.numpy as jnp
from jax.experimental import pallas as pl
from jax.experimental.pallas import tpu as pltpu


def _round_up(n: int, m: int) -> int:
    return ((n + m - 1) // m) * m


def _poly_kernel(w_ref, b_ref, x_ref, o_ref):
    # w_ref: SMEM (3,)  -- [w0, w1, w2]
    # b_ref: SMEM (1,)  -- [bias]
    # x_ref: VMEM (3, tb)  -- batch on the 128-wide lane axis (lane-dense)
    # o_ref: VMEM (1, tb)
    w0 = w_ref[0]
    w1 = w_ref[1]
    w2 = w_ref[2]
    b = b_ref[0]
    # Pure VPU: three scalar-broadcast FMAs + bias; lane-dense unmasked store.
    acc = w0 * x_ref[0:1, :] + w1 * x_ref[1:2, :] + w2 * x_ref[2:3, :] + b
    o_ref[...] = acc.astype(o_ref.dtype)


def poly_model_forward(x, weight, bias, *, block_batch=262144):
    """x: (B, 3) f32, weight: (1, 3) f32, bias: (1,) f32 -> (B, 1) f32."""
    B, in_features = x.shape
    assert in_features == 3
    assert weight.shape == (1, 3)
    assert bias.shape == (1,)

    # Batch tile: multiple of 128 (lane rule), capped so the double-buffered
    # working set (~128 * tb bytes) fits v7x VMEM, and chosen so that any
    # non-trivial batch yields >= 2 grid steps (v7x megacore).
    block_batch = max(128, _round_up(int(block_batch), 128))
    if B <= 256:
        tb = B  # single full-array block (block dims == array dims -> legal)
    else:
        tb = min(block_batch, _round_up(pl.cdiv(B, 2), 128))
    grid = (pl.cdiv(B, tb),)

    # Lane-dense layout: batch on the last (lane) axis.
    xt = x.T  # (3, B)

    out = pl.pallas_call(
        _poly_kernel,
        out_shape=jax.ShapeDtypeStruct((1, B), x.dtype),
        grid=grid,
        in_specs=[
            # Scalar parameters on the scalar path (1-D SMEM, ~16 bytes).
            pl.BlockSpec(memory_space=pltpu.MemorySpace.SMEM),
            pl.BlockSpec(memory_space=pltpu.MemorySpace.SMEM),
            # Double-buffered, lane-dense x tiles; ragged last block is masked.
            pl.BlockSpec((3, tb), lambda i: (0, i)),
        ],
        out_specs=pl.BlockSpec((1, tb), lambda i: (0, i)),
        compiler_params=pltpu.CompilerParams(
            dimension_semantics=("parallel",),
            vmem_limit_bytes=48 * 1024 * 1024,
        ),
    )(weight.reshape(3), bias.reshape(1), xt)

    # (1, B) -> (B, 1): contiguous reshape, no copy.
    return out.reshape(B, 1)


if __name__ == "__main__":
    key = jax.random.PRNGKey(0)
    kx, kw, kb, kx2 = jax.random.split(key, 4)

    B, IN, OUT = 8, 3, 1
    # Deterministic init matching nn.Linear's default uniform(-1/sqrt(fan_in), 1/sqrt(fan_in)).
    bound = 1.0 / jnp.sqrt(jnp.float32(IN))
    weight = jax.random.uniform(kw, (OUT, IN), jnp.float32, -bound, bound)
    bias = jax.random.uniform(kb, (OUT,), jnp.float32, -bound, bound)

    # Small shape (matches the module's forward contract).
    x = jax.random.normal(kx, (B, IN), jnp.float32)
    out = jax.block_until_ready(poly_model_forward(x, weight, bias))
    ref = x @ weight.T + bias
    assert out.shape == (B, OUT)
    assert jnp.allclose(out, ref, atol=1e-5, rtol=1e-5)

    # Exercise the multi-block + ragged-tail grid path (2 blocks: 512 + 488).
    B2 = 1000
    x2 = jax.random.normal(kx2, (B2, IN), jnp.float32)
    out2 = jax.block_until_ready(poly_model_forward(x2, weight, bias, block_batch=512))
    ref2 = x2 @ weight.T + bias
    assert out2.shape == (B2, OUT)
    assert jnp.allclose(out2, ref2, atol=1e-5, rtol=1e-5)

    print("KERNEL_OK")
</pallas_src>

<mosaic_0001>
module attributes {stable_mosaic.version = 11 : i64} {
  func.func @_poly_kernel(%arg0: i32, %arg1: memref<3xf32, #tpu.memory_space<smem>>, %arg2: memref<1xf32, #tpu.memory_space<smem>>, %arg3: memref<3x8xf32, #tpu.memory_space<vmem>>, %arg4: memref<1x8xf32, #tpu.memory_space<vmem>>) attributes {dimension_semantics = [#tpu.dimension_semantics<parallel>], iteration_bounds = array<i64: 1>, scalar_prefetch = 0 : i64, scratch_operands = 0 : i64, tpu.core_type = #tpu.core_type<tc>, window_params = [{transform_indices = @transform_0, window_bounds = array<i64: 3>}, {transform_indices = @transform_1, window_bounds = array<i64: 1>}, {transform_indices = @transform_2, window_bounds = array<i64: 3, 8>}, {transform_indices = @transform_3, window_bounds = array<i64: 1, 8>}]} {
    %c0 = arith.constant 0 : index
    %0 = memref.load %arg1[%c0] : memref<3xf32, #tpu.memory_space<smem>>
    %c1 = arith.constant 1 : index
    %1 = memref.load %arg1[%c1] : memref<3xf32, #tpu.memory_space<smem>>
    %c2 = arith.constant 2 : index
    %2 = memref.load %arg1[%c2] : memref<3xf32, #tpu.memory_space<smem>>
    %c0_0 = arith.constant 0 : index
    %3 = memref.load %arg2[%c0_0] : memref<1xf32, #tpu.memory_space<smem>>
    %c0_1 = arith.constant 0 : index
    %c0_2 = arith.constant 0 : index
    %4 = vector.load %arg3[%c0_1, %c0_2] : memref<3x8xf32, #tpu.memory_space<vmem>>, vector<1x8xf32>
    %5 = vector.broadcast %0 : f32 to vector<1x8xf32>
    %6 = arith.mulf %5, %4 : vector<1x8xf32>
    %c1_3 = arith.constant 1 : index
    %c0_4 = arith.constant 0 : index
    %7 = vector.load %arg3[%c1_3, %c0_4] : memref<3x8xf32, #tpu.memory_space<vmem>>, vector<1x8xf32>
    %8 = vector.broadcast %1 : f32 to vector<1x8xf32>
    %9 = arith.mulf %8, %7 : vector<1x8xf32>
    %10 = arith.addf %6, %9 : vector<1x8xf32>
    %c2_5 = arith.constant 2 : index
    %c0_6 = arith.constant 0 : index
    %11 = vector.load %arg3[%c2_5, %c0_6] : memref<3x8xf32, #tpu.memory_space<vmem>>, vector<1x8xf32>
    %12 = vector.broadcast %2 : f32 to vector<1x8xf32>
    %13 = arith.mulf %12, %11 : vector<1x8xf32>
    %14 = arith.addf %10, %13 : vector<1x8xf32>
    %15 = vector.broadcast %3 : f32 to vector<1x8xf32>
    %16 = arith.addf %14, %15 : vector<1x8xf32>
    %c0_7 = arith.constant 0 : index
    %c0_8 = arith.constant 0 : index
    %17 = vector.load %arg4[%c0_7, %c0_8] : memref<1x8xf32, #tpu.memory_space<vmem>>, vector<1x8xf32>
    tpu.vector_store %arg4[%c0_7, %c0_8], %16 {strides = array<i32>} : memref<1x8xf32, #tpu.memory_space<vmem>>, vector<1x8xf32>,
    return
  }
  func.func @transform_0(%arg0: i32) -> i32 {
    %c0_i32 = arith.constant 0 : i32
    %c0_i32_0 = arith.constant 0 : i32
    return %c0_i32 : i32
  }
  func.func @transform_1(%arg0: i32) -> i32 {
    %c0_i32 = arith.constant 0 : i32
    %c0_i32_0 = arith.constant 0 : i32
    return %c0_i32 : i32
  }
  func.func @transform_2(%arg0: i32) -> (i32, i32) {
    %c0_i32 = arith.constant 0 : i32
    %c0_i32_0 = arith.constant 0 : i32
    return %c0_i32, %arg0 : i32, i32
  }
  func.func @transform_3(%arg0: i32) -> (i32, i32) {
    %c0_i32 = arith.constant 0 : i32
    %c0_i32_0 = arith.constant 0 : i32
    return %c0_i32, %arg0 : i32, i32
  }
}

</mosaic_0001>

<llo_original>
// kernel: tpu_custom_call.1
$region0: #{tpu_custom_call.1}
  #allocation0 [shape = 'u32[]', space=smem, size = 0x4, offset = 0x4, fixed_abs, tag = 'smem constant byte address 0x4 - core index']
  #allocation1 [shape = 'u32[144,128]{1,0:T(1,128)}', space=vmem, size = 0x12000, scoped, tag = 'internal scratch']
  #allocation2 [shape = 'f32[1]{0:T(128)S(6)}', space=smem, size = 0x200, scoped, tag = 'scoped memory for tpu_custom_call.1']
  %s0 = inlined_call_operand.vmem [shape: f32[3], index: 0, kind: input, shape index: {}]
  %s1 = inlined_call_operand.<no memory space> [shape: f32[1], index: 1, kind: input, shape index: {}]
  %s2 = inlined_call_operand.vmem [shape: f32[3,8], index: 2, kind: input, shape index: {}]
  %s3 = inlined_call_operand.hbm [shape: f32[1,8], index: 3, kind: output, shape index: {}]
  %s4 = sld [smem:[#allocation0]]
  $region26: #{tpu_custom_call.1} parent=0
    _
  %s6 = ssub.s32 1, %s4
  %s7 = scalar_select 0, %s6, %s4
  %8 = sst [smem:[#allocation2]] %s1
  $region1: #{tpu_custom_call.1} parent=0
    #allocation3 [shape = 'u8[512]{0}', space=smem, size = 0x200, scoped, tag = 'input window, operand 0, single buffered']
    #allocation4 [shape = 's32[1]{0}', space=sflag, size = 0x4, scoped, tag = 'scoped memory for tpu_custom_call.1']
    #allocation5 [shape = 's32[1]{0}', space=sflag, size = 0x4, scoped, tag = 'scoped memory for tpu_custom_call.1']
    #allocation6 [shape = 'u8[512]{0}', space=vmem, size = 0x400, scoped, tag = 'output window, operand 0, single buffered']
    %9 = vsyncpa [#allocation5], 0
    %10 = vsyncpa [#allocation4], 0
    // Predicated region
    $region2: #{tpu_custom_call.1} parent=1 // pred_check
      _
    $region3: #{tpu_custom_call.1} parent=1 // pred_check_branch
      %12 = sbr.rel (0) target = $region5
    $region4: #{tpu_custom_call.1} parent=1 // pred_region
      %s14 = ssub.s32 16, 16
      %15 = vsyncadd [#allocation5], %s14
      %s17 = sshll.u32 %s0, 4
      %s18 = int_to_ptr.vmem [resolvable:$true] %s17
      %20 = dma.vmem_to_smem %s18, 16, [#allocation3], [#allocation5]
    $region5: #{tpu_custom_call.1} parent=1 // pred_fallthru
      _
    // Predicated region
    $region6: #{tpu_custom_call.1} parent=1 // pred_check
      _
    $region7: #{tpu_custom_call.1} parent=1 // pred_check_branch
      %22 = sbr.rel (0) target = $region9
    $region8: #{tpu_custom_call.1} parent=1 // pred_region
      _
    $region9: #{tpu_custom_call.1} parent=1 // pred_fallthru
      _
    // Predicated region
    $region10: #{tpu_custom_call.1} parent=1 // pred_check
      _
    $region11: #{tpu_custom_call.1} parent=1 // pred_check_branch
      %24 = sbr.rel (0) target = $region13
    $region12: #{tpu_custom_call.1} parent=1 // pred_region
      _
    $region13: #{tpu_custom_call.1} parent=1 // pred_fallthru
      _
    // Predicated region
    $region14: #{tpu_custom_call.1} parent=1 // pred_check
      _
    $region15: #{tpu_custom_call.1} parent=1 // pred_check_branch
      %26 = sbr.rel (0) target = $region17
    $region16: #{tpu_custom_call.1} parent=1 // pred_region
      %27 = dma.done [#allocation5], 16
    $region17: #{tpu_custom_call.1} parent=1 // pred_fallthru
      _
    %28 = sfence
    %s29 = sld [smem:[#allocation3]]
    %s30 = sld [smem:[#allocation3 + $0x1]]
    %s31 = sld [smem:[#allocation3 + $0x2]]
    %s32 = sld [smem:[#allocation2]]
    %v33 = vld [vmem:[%s2] sm:$0x1]
    %v34 = vstv %s29
    %v35 = vmul.f32 %v34, %v33
    %v36 = vld [vmem:[%s2 + $0x1] sm:$0x1]
    %v37 = vstv %s30
    %v38 = vmul.f32 %v37, %v36
    %v39 = vadd.f32 %v35, %v38
    %v40 = vld [vmem:[%s2 + $0x2] sm:$0x1]
    %v41 = vstv %s31
    %v42 = vmul.f32 %v41, %v40
    %v43 = vadd.f32 %v39, %v42
    %v44 = vstv %s32
    %v45 = vadd.f32 %v43, %v44
    %vm46 = vcmask 57344
    %47 = vst.msk [vmem:[#allocation6] sm:$0x1] %vm46, %v45
    // Predicated region
    $region18: #{tpu_custom_call.1} parent=1 // pred_check
      _
    $region19: #{tpu_custom_call.1} parent=1 // pred_check_branch
      %49 = sbr.rel (0) target = $region21
    $region20: #{tpu_custom_call.1} parent=1 // pred_region
      %s51 = ssub.s32 16, 16
      %52 = vsyncadd [#allocation4], %s51
      %s54 = sshll.u32 [#allocation6], 4
      %s55 = int_to_ptr.vmem [resolvable:$true] %s54
      %57 = dma.vmem_to_hbm [thread:$0]  %s55, 16, %s3, [#allocation4]
    $region21: #{tpu_custom_call.1} parent=1 // pred_fallthru
      _
    // Predicated region
    $region22: #{tpu_custom_call.1} parent=1 // pred_check
      _
    $region23: #{tpu_custom_call.1} parent=1 // pred_check_branch
      %59 = sbr.rel (0) target = $region25
    $region24: #{tpu_custom_call.1} parent=1 // pred_region
      %60 = dma.done [#allocation4], 16
    $region25: #{tpu_custom_call.1} parent=1 // pred_fallthru
      _
    %61 = vsyncpa [#allocation4], 1
    %62 = vsyncpa [#allocation5], 1

</llo_original>
